<compile_context>
chip_gen: v6e
topology: v6e:2x2x1
jax: 0.10.0
libtpu: 0.0.40
codegen_flags: <defaults>
</compile_context>

<pallas_src>
import jax
import jax.numpy as jnp
from jax import lax
from jax.experimental import pallas as pl
from jax.experimental.pallas import tpu as pltpu

_LANE = 128


def _round_up(x, m):
    return ((x + m - 1) // m) * m


def _pad2d(a, rows, cols):
    return jnp.pad(a, ((0, rows - a.shape[0]), (0, cols - a.shape[1])))


def _pick_node_tiling(num_nodes):
    """Return (padded_N, TM (dst tile), TK (src / reduction tile))."""
    if num_nodes <= 1024:
        # Single tile: everything resident, grid (1, 1), no per-step overhead.
        n_pad = _round_up(num_nodes, _LANE)
        return n_pad, n_pad, n_pad
    n_pad = _round_up(num_nodes, 1024)
    tm = 1024
    tk = 2048 if n_pad % 2048 == 0 else 1024
    return n_pad, tm, tk


# ---------------------------------------------------------------------------
# Pallas kernels (factories close over static tile sizes / node count)
# ---------------------------------------------------------------------------
def _make_conv_kernel(tm, tk, num_nodes):
    def kernel(adj_ref, x_ref, invdeg_ref, wl_ref, wr_ref, b_ref, out_ref, acc_ref):
        """One SAGEConv layer (mean aggregation) + ReLU, tiled over (dst, src).

        adj_ref    : (TM, TK) int8   exact edge counts A[dst, src]
        x_ref      : (Np, Fp) bf16   FULL node features, VMEM-resident
        invdeg_ref : (TM, 1)  f32    1 / max(in-degree, 1) for this dst tile
        wl_ref     : (Fp, Hp) bf16   W_l (neighbor transform)
        wr_ref     : (Fp, Hp) bf16   W_r (root transform)
        b_ref      : (1, Hp)  f32    b_l
        acc_ref    : (TM, Fp) f32    VMEM accumulator for the aggregation
        """
        i = pl.program_id(0)
        k = pl.program_id(1)

        @pl.when(k == 0)
        def _init():
            acc_ref[...] = jnp.zeros_like(acc_ref)

        # Partial neighbor sum on the MXU at bf16 rate, f32 accumulation.
        src0 = pl.multiple_of(k * tk, tk)
        acc_ref[...] += jnp.dot(adj_ref[...].astype(jnp.bfloat16),
                                x_ref[pl.ds(src0, tk), :],
                                preferred_element_type=jnp.float32)

        @pl.when(k == pl.num_programs(1) - 1)
        def _finalize():
            dst0 = pl.multiple_of(i * tm, tm)
            # Exact mean: f32 accumulator scaled by f32 inverse degree.
            agg = acc_ref[...] * invdeg_ref[...]                     # (TM, Fp)
            h = jnp.dot(agg.astype(jnp.bfloat16), wl_ref[...],
                        preferred_element_type=jnp.float32)
            h = h + jnp.dot(x_ref[pl.ds(dst0, tm), :], wr_ref[...],
                            preferred_element_type=jnp.float32)
            h = jnp.maximum(h + b_ref[...], 0.0)
            # Zero padded destination rows (otherwise they'd be relu(b_l)).
            row = dst0 + lax.broadcasted_iota(jnp.int32, (tm, 1), 0)
            out_ref[...] = jnp.where(row < num_nodes, h, 0.0).astype(out_ref.dtype)

    return kernel


def _pool_lin_kernel(pool_ref, h_ref, invc_ref, w_ref, b_ref, out_ref, acc_ref):
    """global_mean_pool + final Linear.

    pool_ref : (Gp, TK) bf16  exact 0/1 graph-membership matrix tile
    h_ref    : (TK, Hp) bf16  node embeddings (src rows)
    invc_ref : (Gp, 1)  f32   1 / max(|graph g|, 1)
    w_ref    : (Hp, Cp) f32 ; b_ref : (1, Cp) f32
    """
    k = pl.program_id(0)

    @pl.when(k == 0)
    def _init():
        acc_ref[...] = jnp.zeros_like(acc_ref)

    acc_ref[...] += jnp.dot(pool_ref[...], h_ref[...],
                            preferred_element_type=jnp.float32)

    @pl.when(k == pl.num_programs(0) - 1)
    def _finalize():
        pooled = acc_ref[...] * invc_ref[...]                # exact f32 mean
        # Dropout(p=0.5) is identity at inference time.
        out_ref[...] = (jnp.dot(pooled, w_ref[...],
                                preferred_element_type=jnp.float32)
                        + b_ref[...])


# ---------------------------------------------------------------------------
# pallas_call wrappers
# ---------------------------------------------------------------------------
def sage_conv(x_p, adj_p, invdeg_p, wl_p, wr_p, b_p, *, tm, tk, num_nodes):
    n_pad, f_pad = x_p.shape
    h_pad = wl_p.shape[1]
    grid = (n_pad // tm, n_pad // tk)
    return pl.pallas_call(
        _make_conv_kernel(tm, tk, num_nodes),
        grid=grid,
        in_specs=[
            pl.BlockSpec((tm, tk), lambda i, k: (i, k)),          # adj tile (int8)
            pl.BlockSpec((n_pad, f_pad), lambda i, k: (0, 0)),    # X resident (bf16)
            pl.BlockSpec((tm, 1), lambda i, k: (i, 0)),           # 1/deg (f32)
            pl.BlockSpec((f_pad, h_pad), lambda i, k: (0, 0)),    # W_l (bf16)
            pl.BlockSpec((f_pad, h_pad), lambda i, k: (0, 0)),    # W_r (bf16)
            pl.BlockSpec((1, h_pad), lambda i, k: (0, 0)),        # bias (f32)
        ],
        out_specs=pl.BlockSpec((tm, h_pad), lambda i, k: (i, 0)),
        out_shape=jax.ShapeDtypeStruct((n_pad, h_pad), jnp.bfloat16),
        scratch_shapes=[pltpu.VMEM((tm, f_pad), jnp.float32)],
        compiler_params=pltpu.CompilerParams(
            dimension_semantics=("parallel", "arbitrary"),
            vmem_limit_bytes=48 << 20,      # safe headroom even on v7x (64 MiB)
        ),
    )(adj_p, x_p, invdeg_p, wl_p, wr_p, b_p)


def pool_and_classify(h_p, pool_p, invc_p, w_p, b_p, *, tk):
    g_pad, n_pad = pool_p.shape
    hid_pad = h_p.shape[1]
    c_pad = w_p.shape[1]
    grid = (n_pad // tk,)
    return pl.pallas_call(
        _pool_lin_kernel,
        grid=grid,
        in_specs=[
            pl.BlockSpec((g_pad, tk), lambda k: (0, k)),          # 0/1 pool (bf16)
            pl.BlockSpec((tk, hid_pad), lambda k: (k, 0)),        # h (bf16)
            pl.BlockSpec((g_pad, 1), lambda k: (0, 0)),           # 1/count (f32)
            pl.BlockSpec((hid_pad, c_pad), lambda k: (0, 0)),     # W_lin (f32)
            pl.BlockSpec((1, c_pad), lambda k: (0, 0)),           # b_lin (f32)
        ],
        out_specs=pl.BlockSpec((g_pad, c_pad), lambda k: (0, 0)),
        out_shape=jax.ShapeDtypeStruct((g_pad, c_pad), jnp.float32),
        scratch_shapes=[pltpu.VMEM((g_pad, hid_pad), jnp.float32)],
        compiler_params=pltpu.CompilerParams(
            dimension_semantics=("arbitrary",),
            vmem_limit_bytes=48 << 20,
        ),
    )(pool_p, h_p, invc_p, w_p, b_p)


# ---------------------------------------------------------------------------
# Graph / parameter preparation (plain JAX, done once per graph)
# ---------------------------------------------------------------------------
def build_adj_int8(edge_index, num_nodes, n_pad):
    """Exact int8 edge-count adjacency A[dst, src] (padded) + f32 1/deg column."""
    src, dst = edge_index[0], edge_index[1]
    a = jnp.zeros((num_nodes, num_nodes), jnp.float32).at[dst, src].add(1.0)
    deg = jnp.sum(a, axis=1, keepdims=True)
    inv_deg = 1.0 / jnp.maximum(deg, 1.0)
    a_p = jnp.pad(a, ((0, n_pad - num_nodes), (0, n_pad - num_nodes)))
    inv_p = jnp.pad(inv_deg, ((0, n_pad - num_nodes), (0, 0)))
    return a_p.astype(jnp.int8), inv_p


def build_pool(batch, num_graphs, n_pad, g_pad):
    """Exact 0/1 pooling matrix (bf16) + f32 1/|graph| column, zero-padded."""
    onehot = (batch[None, :] == jnp.arange(num_graphs)[:, None]).astype(jnp.float32)
    counts = jnp.sum(onehot, axis=1, keepdims=True)
    inv_c = 1.0 / jnp.maximum(counts, 1.0)
    p = jnp.pad(onehot, ((0, g_pad - num_graphs), (0, n_pad - batch.shape[0])))
    inv_p = jnp.pad(inv_c, ((0, g_pad - num_graphs), (0, 0)))
    return p.astype(jnp.bfloat16), inv_p


def pad_params(convs, lin_w, lin_b):
    """Pad all lane dims to 128; conv weights in bf16, biases/classifier in f32."""
    padded_convs = []
    for (w_l, b_l, w_r) in convs:
        f_in, hid = w_l.shape
        fp, hp = _round_up(f_in, _LANE), _round_up(hid, _LANE)
        padded_convs.append((
            _pad2d(w_l, fp, hp).astype(jnp.bfloat16),
            _pad2d(w_r, fp, hp).astype(jnp.bfloat16),
            _pad2d(b_l, 1, hp),
        ))
    hid, c = lin_w.shape
    hp, cp = _round_up(hid, _LANE), _round_up(c, _LANE)
    return {"convs": padded_convs,
            "lin_w": _pad2d(lin_w, hp, cp),
            "lin_b": _pad2d(lin_b, 1, cp)}


def sage_forward(x, edge_index, batch, convs, lin_w, lin_b, *, num_graphs):
    n, f = x.shape
    n_pad, tm, tk = _pick_node_tiling(n)
    g_pad = _round_up(num_graphs, 16)

    adj_p, invdeg_p = build_adj_int8(edge_index, n, n_pad)       # int8 / f32
    pool_p, invc_p = build_pool(batch, num_graphs, n_pad, g_pad)  # bf16 / f32
    params = pad_params(convs, lin_w, lin_b)

    f_pad = _round_up(f, _LANE)
    h = jnp.pad(x, ((0, n_pad - n), (0, f_pad - f))).astype(jnp.bfloat16)

    for (wl_p, wr_p, b_p) in params["convs"]:
        h = sage_conv(h, adj_p, invdeg_p, wl_p, wr_p, b_p,
                      tm=tm, tk=tk, num_nodes=n)

    pool_tk = n_pad if n_pad <= 2048 else 1024
    out_p = pool_and_classify(h, pool_p, invc_p,
                              params["lin_w"], params["lin_b"], tk=pool_tk)
    return out_p[:num_graphs, :lin_w.shape[1]]


# ---------------------------------------------------------------------------
# Pure-JAX reference (for a correctness spot-check)
# ---------------------------------------------------------------------------
def sage_reference(x, edge_index, batch, convs, lin_w, lin_b, num_graphs):
    src, dst = edge_index[0], edge_index[1]
    a = jnp.zeros((x.shape[0], x.shape[0]), jnp.float32).at[dst, src].add(1.0)
    deg = jnp.maximum(jnp.sum(a, axis=1, keepdims=True), 1.0)
    h = x
    for (w_l, b_l, w_r) in convs:
        agg = (a @ h) / deg
        h = jax.nn.relu(agg @ w_l + b_l + h @ w_r)
    onehot = (batch[None, :] == jnp.arange(num_graphs)[:, None]).astype(jnp.float32)
    pooled = (onehot @ h) / jnp.maximum(onehot.sum(axis=1, keepdims=True), 1.0)
    return pooled @ lin_w + lin_b


# ---------------------------------------------------------------------------
if __name__ == "__main__":
    key = jax.random.PRNGKey(0)
    N, F_IN, HIDDEN, NUM_CLASSES, NUM_GRAPHS = 16, 8, 32, 4, 2
    NUM_LAYERS, E = 2, 40

    keys = jax.random.split(key, 16)
    x = jax.random.normal(keys[0], (N, F_IN), jnp.float32)
    src = jax.random.randint(keys[1], (E,), 0, N)
    dst = jax.random.randint(keys[2], (E,), 0, N)
    edge_index = jnp.stack([src, dst])                      # (2, E), PyG style
    batch = jnp.concatenate([jnp.zeros(N // 2, jnp.int32),
                             jnp.ones(N - N // 2, jnp.int32)])

    # Deterministic synthetic parameters (shapes from SAGE.__init__).
    convs = []
    in_c = F_IN
    ki = 3
    for _ in range(NUM_LAYERS):
        w_l = 0.1 * jax.random.normal(keys[ki], (in_c, HIDDEN), jnp.float32); ki += 1
        b_l = 0.1 * jax.random.normal(keys[ki], (1, HIDDEN), jnp.float32);    ki += 1
        w_r = 0.1 * jax.random.normal(keys[ki], (in_c, HIDDEN), jnp.float32); ki += 1
        convs.append((w_l, b_l, w_r))
        in_c = HIDDEN
    lin_w = 0.1 * jax.random.normal(keys[ki], (HIDDEN, NUM_CLASSES), jnp.float32); ki += 1
    lin_b = 0.1 * jax.random.normal(keys[ki], (1, NUM_CLASSES), jnp.float32)

    out = sage_forward(x, edge_index, batch, convs, lin_w, lin_b,
                       num_graphs=NUM_GRAPHS)
    out = jax.block_until_ready(out)
    assert out.shape == (NUM_GRAPHS, NUM_CLASSES)
    assert jnp.all(jnp.isfinite(out))

    ref = sage_reference(x, edge_index, batch, convs, lin_w, lin_b, NUM_GRAPHS)
    assert jnp.allclose(out, ref, rtol=2e-2, atol=2e-2), (out, ref)
    print("KERNEL_OK")
</pallas_src>

<mosaic_0001>
module attributes {stable_mosaic.version = 11 : i64} {
  func.func @kernel(%arg0: i32, %arg1: i32, %arg2: memref<128x128xi8, #tpu.memory_space<vmem>>, %arg3: memref<128x128xbf16, #tpu.memory_space<vmem>>, %arg4: memref<128x1xf32, #tpu.memory_space<vmem>>, %arg5: memref<128x128xbf16, #tpu.memory_space<vmem>>, %arg6: memref<128x128xbf16, #tpu.memory_space<vmem>>, %arg7: memref<1x128xf32, #tpu.memory_space<vmem>>, %arg8: memref<128x128xbf16, #tpu.memory_space<vmem>>, %arg9: memref<128x128xf32, #tpu.memory_space<vmem>>) attributes {dimension_semantics = [#tpu.dimension_semantics<parallel>, #tpu.dimension_semantics<arbitrary>], iteration_bounds = array<i64: 1, 1>, scalar_prefetch = 0 : i64, scratch_operands = 1 : i64, tpu.core_type = #tpu.core_type<tc>, window_params = [{transform_indices = @transform_0, window_bounds = array<i64: 128, 128>}, {pipeline_mode = #tpu.pipeline_mode<synchronous>, transform_indices = @transform_1, window_bounds = array<i64: 128, 128>}, {transform_indices = @transform_2, window_bounds = array<i64: 128, 1>}, {pipeline_mode = #tpu.pipeline_mode<synchronous>, transform_indices = @transform_3, window_bounds = array<i64: 128, 128>}, {pipeline_mode = #tpu.pipeline_mode<synchronous>, transform_indices = @transform_4, window_bounds = array<i64: 128, 128>}, {pipeline_mode = #tpu.pipeline_mode<synchronous>, transform_indices = @transform_5, window_bounds = array<i64: 1, 128>}, {transform_indices = @transform_6, window_bounds = array<i64: 128, 128>}]} {
    %c0_i32 = arith.constant 0 : i32
    %0 = arith.cmpi eq, %arg1, %c0_i32 : i32
    %1 = arith.extui %0 : i1 to i32
    %c0_i32_0 = arith.constant 0 : i32
    %2 = arith.cmpi ne, %1, %c0_i32_0 : i32
    scf.if %2 {
      %cst_9 = arith.constant 0.000000e+00 : f32
      %16 = vector.broadcast %cst_9 : f32 to vector<128x128xf32>
      %c0_10 = arith.constant 0 : index
      %c0_11 = arith.constant 0 : index
      %17 = vector.load %arg9[%c0_10, %c0_11] : memref<128x128xf32, #tpu.memory_space<vmem>>, vector<128x128xf32>
      tpu.vector_store %arg9[%c0_10, %c0_11], %16 {strides = array<i32>} : memref<128x128xf32, #tpu.memory_space<vmem>>, vector<128x128xf32>,
    } else {
    }
    %c128_i32 = arith.constant 128 : i32
    %3 = arith.muli %arg1, %c128_i32 : i32
    %4 = tpu.assume_multiple %3, 128 : i32
    %c0 = arith.constant 0 : index
    %c0_1 = arith.constant 0 : index
    %5 = vector.load %arg9[%c0, %c0_1] : memref<128x128xf32, #tpu.memory_space<vmem>>, vector<128x128xf32>
    %c0_2 = arith.constant 0 : index
    %c0_3 = arith.constant 0 : index
    %6 = vector.load %arg2[%c0_2, %c0_3] : memref<128x128xi8, #tpu.memory_space<vmem>>, vector<128x128xi8>
    %7 = arith.sitofp %6 : vector<128x128xi8> to vector<128x128xbf16>
    %8 = arith.index_cast %4 : i32 to index
    %c0_4 = arith.constant 0 : index
    %9 = vector.load %arg3[%8, %c0_4] : memref<128x128xbf16, #tpu.memory_space<vmem>>, vector<128x128xbf16>
    %cst = arith.constant dense<0.000000e+00> : vector<128x128xf32>
    %10 = tpu.matmul %7, %9, %cst {dimension_numbers = #tpu.dot_dimension_numbers<[1], [0], [0], [1], [0, 0, 1, 1], [], []>} : vector<128x128xbf16>, vector<128x128xbf16>, vector<128x128xf32> -> vector<128x128xf32>
    %11 = arith.addf %5, %10 : vector<128x128xf32>
    %c0_5 = arith.constant 0 : index
    %c0_6 = arith.constant 0 : index
    %12 = vector.load %arg9[%c0_5, %c0_6] : memref<128x128xf32, #tpu.memory_space<vmem>>, vector<128x128xf32>
    tpu.vector_store %arg9[%c0_5, %c0_6], %11 {strides = array<i32>} : memref<128x128xf32, #tpu.memory_space<vmem>>, vector<128x128xf32>,
    %c0_i32_7 = arith.constant 0 : i32
    %13 = arith.cmpi eq, %arg1, %c0_i32_7 : i32
    %14 = arith.extui %13 : i1 to i32
    %c0_i32_8 = arith.constant 0 : i32
    %15 = arith.cmpi ne, %14, %c0_i32_8 : i32
    scf.if %15 {
      %c128_i32_9 = arith.constant 128 : i32
      %16 = arith.muli %arg0, %c128_i32_9 : i32
      %17 = tpu.assume_multiple %16, 128 : i32
      %c0_10 = arith.constant 0 : index
      %c0_11 = arith.constant 0 : index
      %18 = vector.load %arg9[%c0_10, %c0_11] : memref<128x128xf32, #tpu.memory_space<vmem>>, vector<128x128xf32>
      %c0_12 = arith.constant 0 : index
      %c0_13 = arith.constant 0 : index
      %19 = vector.load %arg4[%c0_12, %c0_13] : memref<128x1xf32, #tpu.memory_space<vmem>>, vector<128x1xf32>
      %20 = vector.broadcast %19 : vector<128x1xf32> to vector<128x128xf32>
      %21 = arith.mulf %18, %20 : vector<128x128xf32>
      %22 = arith.truncf %21 : vector<128x128xf32> to vector<128x128xbf16>
      %c0_14 = arith.constant 0 : index
      %c0_15 = arith.constant 0 : index
      %23 = vector.load %arg5[%c0_14, %c0_15] : memref<128x128xbf16, #tpu.memory_space<vmem>>, vector<128x128xbf16>
      %cst_16 = arith.constant dense<0.000000e+00> : vector<128x128xf32>
      %24 = tpu.matmul %22, %23, %cst_16 {dimension_numbers = #tpu.dot_dimension_numbers<[1], [0], [0], [1], [0, 0, 1, 1], [], []>} : vector<128x128xbf16>, vector<128x128xbf16>, vector<128x128xf32> -> vector<128x128xf32>
      %25 = arith.index_cast %17 : i32 to index
      %c0_17 = arith.constant 0 : index
      %26 = vector.load %arg3[%25, %c0_17] : memref<128x128xbf16, #tpu.memory_space<vmem>>, vector<128x128xbf16>
      %c0_18 = arith.constant 0 : index
      %c0_19 = arith.constant 0 : index
      %27 = vector.load %arg6[%c0_18, %c0_19] : memref<128x128xbf16, #tpu.memory_space<vmem>>, vector<128x128xbf16>
      %cst_20 = arith.constant dense<0.000000e+00> : vector<128x128xf32>
      %28 = tpu.matmul %26, %27, %cst_20 {dimension_numbers = #tpu.dot_dimension_numbers<[1], [0], [0], [1], [0, 0, 1, 1], [], []>} : vector<128x128xbf16>, vector<128x128xbf16>, vector<128x128xf32> -> vector<128x128xf32>
      %29 = arith.addf %24, %28 : vector<128x128xf32>
      %c0_21 = arith.constant 0 : index
      %c0_22 = arith.constant 0 : index
      %30 = vector.load %arg7[%c0_21, %c0_22] : memref<1x128xf32, #tpu.memory_space<vmem>>, vector<1x128xf32>
      %31 = vector.broadcast %30 : vector<1x128xf32> to vector<128x128xf32>
      %32 = arith.addf %29, %31 : vector<128x128xf32>
      %cst_23 = arith.constant 0.000000e+00 : f32
      %33 = vector.broadcast %cst_23 : f32 to vector<128x128xf32>
      %34 = arith.maximumf %32, %33 : vector<128x128xf32>
      %35 = tpu.iota {dimensions = array<i32: 0>} : vector<128x1xi32>
      %36 = vector.broadcast %17 : i32 to vector<128x1xi32>
      %37 = arith.addi %36, %35 : vector<128x1xi32>
      %c16_i32 = arith.constant 16 : i32
      %38 = vector.broadcast %c16_i32 : i32 to vector<128x1xi32>
      %39 = arith.cmpi slt, %37, %38 : vector<128x1xi32>
      %cst_24 = arith.constant 0.000000e+00 : f32
      %40 = vector.shape_cast %39 : vector<128x1xi1> to vector<128x1xi1>
      %41 = vector.broadcast %40 : vector<128x1xi1> to vector<128x128xi1>
      %42 = vector.broadcast %cst_24 : f32 to vector<128x128xf32>
      %43 = arith.select %41, %34, %42 : vector<128x128xi1>, vector<128x128xf32>
      %44 = arith.truncf %43 : vector<128x128xf32> to vector<128x128xbf16>
      %c0_25 = arith.constant 0 : index
      %c0_26 = arith.constant 0 : index
      %45 = vector.load %arg8[%c0_25, %c0_26] : memref<128x128xbf16, #tpu.memory_space<vmem>>, vector<128x128xbf16>
      tpu.vector_store %arg8[%c0_25, %c0_26], %44 {strides = array<i32>} : memref<128x128xbf16, #tpu.memory_space<vmem>>, vector<128x128xbf16>,
    } else {
    }
    return
  }
  func.func @transform_0(%arg0: i32, %arg1: i32) -> (i32, i32) {
    %c0_i32 = arith.constant 0 : i32
    return %arg0, %arg1 : i32, i32
  }
  func.func @transform_1(%arg0: i32, %arg1: i32) -> (i32, i32) {
    %c0_i32 = arith.constant 0 : i32
    %c0_i32_0 = arith.constant 0 : i32
    %c0_i32_1 = arith.constant 0 : i32
    return %c0_i32, %c0_i32_0 : i32, i32
  }
  func.func @transform_2(%arg0: i32, %arg1: i32) -> (i32, i32) {
    %c0_i32 = arith.constant 0 : i32
    %c0_i32_0 = arith.constant 0 : i32
    return %arg0, %c0_i32 : i32, i32
  }
  func.func @transform_3(%arg0: i32, %arg1: i32) -> (i32, i32) {
    %c0_i32 = arith.constant 0 : i32
    %c0_i32_0 = arith.constant 0 : i32
    %c0_i32_1 = arith.constant 0 : i32
    return %c0_i32, %c0_i32_0 : i32, i32
  }
  func.func @transform_4(%arg0: i32, %arg1: i32) -> (i32, i32) {
    %c0_i32 = arith.constant 0 : i32
    %c0_i32_0 = arith.constant 0 : i32
    %c0_i32_1 = arith.constant 0 : i32
    return %c0_i32, %c0_i32_0 : i32, i32
  }
  func.func @transform_5(%arg0: i32, %arg1: i32) -> (i32, i32) {
    %c0_i32 = arith.constant 0 : i32
    %c0_i32_0 = arith.constant 0 : i32
    %c0_i32_1 = arith.constant 0 : i32
    return %c0_i32, %c0_i32_0 : i32, i32
  }
  func.func @transform_6(%arg0: i32, %arg1: i32) -> (i32, i32) {
    %c0_i32 = arith.constant 0 : i32
    %c0_i32_0 = arith.constant 0 : i32
    return %arg0, %c0_i32 : i32, i32
  }
}

</mosaic_0001>

<llo_original>
// kernel: tpu_custom_call.1
$region0: #{tpu_custom_call.1}
  #allocation0 [shape = 'u32[]', space=smem, size = 0x4, offset = 0x4, fixed_abs, tag = 'smem constant byte address 0x4 - core index']
  #allocation1 [shape = 'u32[144,128]{1,0:T(1,128)}', space=vmem, size = 0x12000, scoped, tag = 'internal scratch']
  #allocation2 [shape = 'f32[128,128]{1,0:T(8,128)}', space=vmem, size = 0x10000, scoped, tag = 'scratch operand']
  %s0 = inlined_call_operand.hbm [shape: s8[128,128], index: 0, kind: input, shape index: {}]
  %s1 = inlined_call_operand.vmem [shape: bf16[128,128], index: 1, kind: input, shape index: {}]
  %s2 = inlined_call_operand.vmem [shape: f32[128,1], index: 2, kind: input, shape index: {}]
  %s3 = inlined_call_operand.vmem [shape: bf16[128,128], index: 3, kind: input, shape index: {}]
  %s4 = inlined_call_operand.hbm [shape: bf16[128,128], index: 4, kind: input, shape index: {}]
  %s5 = inlined_call_operand.vmem [shape: f32[1,128], index: 5, kind: input, shape index: {}]
  %s6 = inlined_call_operand.hbm [shape: bf16[128,128], index: 6, kind: output, shape index: {}]
  %s7 = sld [smem:[#allocation0]]
  $region50: #{tpu_custom_call.1} parent=0
    _
  %s9 = ssub.s32 1, %s7
  %s10 = scalar_select 0, %s9, %s7
  $region1: #{tpu_custom_call.1} parent=0
    #allocation3 [shape = 'u8[16384]{0}', space=vmem, size = 0x4000, scoped, tag = 'input window, operand 0, single buffered']
    #allocation4 [shape = 's32[1]{0}', space=sflag, size = 0x4, scoped, tag = 'scoped memory for tpu_custom_call.1']
    #allocation5 [shape = 's32[1]{0}', space=sflag, size = 0x4, scoped, tag = 'scoped memory for tpu_custom_call.1']
    #allocation6 [shape = 'u8[32768]{0}', space=vmem, size = 0x8000, scoped, tag = 'input window, operand 4, single buffered']
    #allocation7 [shape = 's32[1]{0}', space=sflag, size = 0x4, scoped, tag = 'scoped memory for tpu_custom_call.1']
    #allocation8 [shape = 'u8[32768]{0}', space=vmem, size = 0x8000, scoped, tag = 'output window, operand 0, single buffered']
    %11 = vsyncpa [#allocation4], 0
    %12 = vsyncpa [#allocation7], 0
    %13 = vsyncpa [#allocation5], 0
    // Predicated region
    $region2: #{tpu_custom_call.1} parent=1 // pred_check
      _
    $region3: #{tpu_custom_call.1} parent=1 // pred_check_branch
      %15 = sbr.rel (0) target = $region5
    $region4: #{tpu_custom_call.1} parent=1 // pred_region
      %s17 = ssub.s32 512, 512
      %18 = vsyncadd [#allocation4], %s17
      %s19 = sshll.u32 [#allocation3], 4
      %s20 = int_to_ptr.vmem [resolvable:$true] %s19
      %25 = dma.hbm_to_vmem [thread:$0]  %s0, 512, %s20, [#allocation4], 128, 128, 8
    $region5: #{tpu_custom_call.1} parent=1 // pred_fallthru
      _
    // Predicated region
    $region6: #{tpu_custom_call.1} parent=1 // pred_check
      _
    $region7: #{tpu_custom_call.1} parent=1 // pred_check_branch
      %27 = sbr.rel (0) target = $region9
    $region8: #{tpu_custom_call.1} parent=1 // pred_region
      _
    $region9: #{tpu_custom_call.1} parent=1 // pred_fallthru
      _
    // Predicated region
    $region10: #{tpu_custom_call.1} parent=1 // pred_check
      _
    $region11: #{tpu_custom_call.1} parent=1 // pred_check_branch
      %29 = sbr.rel (0) target = $region13
    $region12: #{tpu_custom_call.1} parent=1 // pred_region
      _
    $region13: #{tpu_custom_call.1} parent=1 // pred_fallthru
      _
    // Predicated region
    $region14: #{tpu_custom_call.1} parent=1 // pred_check
      _
    $region15: #{tpu_custom_call.1} parent=1 // pred_check_branch
      %31 = sbr.rel (0) target = $region17
    $region16: #{tpu_custom_call.1} parent=1 // pred_region
      _
    $region17: #{tpu_custom_call.1} parent=1 // pred_fallthru
      _
    // Predicated region
    $region18: #{tpu_custom_call.1} parent=1 // pred_check
      _
    $region19: #{tpu_custom_call.1} parent=1 // pred_check_branch
      %33 = sbr.rel (0) target = $region21
    $region20: #{tpu_custom_call.1} parent=1 // pred_region
      %s35 = ssub.s32 1024, 1024
      %36 = vsyncadd [#allocation7], %s35
      %s37 = sshll.u32 [#allocation6], 4
      %s38 = int_to_ptr.vmem [resolvable:$true] %s37
      %43 = dma.hbm_to_vmem [thread:$0]  %s4, 1024, %s38, [#allocation7], 64, 64, 4
    $region21: #{tpu_custom_call.1} parent=1 // pred_fallthru
      _
    // Predicated region
    $region22: #{tpu_custom_call.1} parent=1 // pred_check
      _
    $region23: #{tpu_custom_call.1} parent=1 // pred_check_branch
      %45 = sbr.rel (0) target = $region25
    $region24: #{tpu_custom_call.1} parent=1 // pred_region
      _
    $region25: #{tpu_custom_call.1} parent=1 // pred_fallthru
      _
    // Predicated region
    $region26: #{tpu_custom_call.1} parent=1 // pred_check
      _
    $region27: #{tpu_custom_call.1} parent=1 // pred_check_branch
      %47 = sbr.rel (0) target = $region29
    $region28: #{tpu_custom_call.1} parent=1 // pred_region
      %48 = dma.done [#allocation4], 512
    $region29: #{tpu_custom_call.1} parent=1 // pred_fallthru
      _
    // Predicated region
    $region30: #{tpu_custom_call.1} parent=1 // pred_check
      _
    $region31: #{tpu_custom_call.1} parent=1 // pred_check_branch
      %50 = sbr.rel (0) target = $region33
    $region32: #{tpu_custom_call.1} parent=1 // pred_region
      %51 = dma.done [#allocation7], 1024
    $region33: #{tpu_custom_call.1} parent=1 // pred_fallthru
      _
    %p53 = scmp.eq.s32.totalorder 0, 0
    // Predicated region
    $region34: #{tpu_custom_call.1} parent=1 // pred_check
      %p54 = pneg %p53
    $region35: #{tpu_custom_call.1} parent=1 // pred_check_branch
      %56 = sbr.rel (%p54) target = $region37
    $region36: #{tpu_custom_call.1} parent=1 // pred_region
      %57 = vst [vmem:[#allocation2] sm:$0xff] 0.0
      %58 = vst [vmem:[#allocation2 + $0x8] sm:$0xff] 0.0
      %59 = vst [vmem:[#allocation2 + $0x10] sm:$0xff] 0.0
      %60 = vst [vmem:[#allocation2 + $0x18] sm:$0xff] 0.0
      %61 = vst [vmem:[#allocation2 + $0x20] sm:$0xff] 0.0
      %62 = vst [vmem:[#allocation2 + $0x28] sm:$0xff] 0.0
      %63 = vst [vmem:[#allocation2 + $0x30] sm:$0xff] 0.0
      %64 = vst [vmem:[#allocation2 + $0x38] sm:$0xff] 0.0
      %65 = vst [vmem:[#allocation2 + $0x40] sm:$0xff] 0.0
      %66 = vst [vmem:[#allocation2 + $0x48] sm:$0xff] 0.0
      %67 = vst [vmem:[#allocation2 + $0x50] sm:$0xff] 0.0
      %68 = vst [vmem:[#allocation2 + $0x58] sm:$0xff] 0.0
      %69 = vst [vmem:[#allocation2 + $0x60] sm:$0xff] 0.0
      %70 = vst [vmem:[#allocation2 + $0x68] sm:$0xff] 0.0
      %71 = vst [vmem:[#allocation2 + $0x70] sm:$0xff] 0.0
      %72 = vst [vmem:[#allocation2 + $0x78] sm:$0xff] 0.0
    $region37: #{tpu_custom_call.1} parent=1 // pred_fallthru
      _
    %s73 = smul.u32 0, 128
    %v74 = vld [vmem:[#allocation2] sm:$0xff]
    %v75 = vld [vmem:[#allocation2 + $0x8] sm:$0xff]
    %v76 = vld [vmem:[#allocation2 + $0x10] sm:$0xff]
    %v77 = vld [vmem:[#allocation2 + $0x18] sm:$0xff]
    %v78 = vld [vmem:[#allocation2 + $0x20] sm:$0xff]
    %v79 = vld [vmem:[#allocation2 + $0x28] sm:$0xff]
    %v80 = vld [vmem:[#allocation2 + $0x30] sm:$0xff]
    %v81 = vld [vmem:[#allocation2 + $0x38] sm:$0xff]
    %v82 = vld [vmem:[#allocation2 + $0x40] sm:$0xff]
    %v83 = vld [vmem:[#allocation2 + $0x48] sm:$0xff]
    %v84 = vld [vmem:[#allocation2 + $0x50] sm:$0xff]
    %v85 = vld [vmem:[#allocation2 + $0x58] sm:$0xff]
    %v86 = vld [vmem:[#allocation2 + $0x60] sm:$0xff]
    %v87 = vld [vmem:[#allocation2 + $0x68] sm:$0xff]
    %v88 = vld [vmem:[#allocation2 + $0x70] sm:$0xff]
    %v89 = vld [vmem:[#allocation2 + $0x78] sm:$0xff]
    %v90 = vld [vmem:[#allocation3] sm:$0xff]
    %v91 = vld [vmem:[#allocation3 + $0x8] sm:$0xff]
    %v92 = vld [vmem:[#allocation3 + $0x10] sm:$0xff]
    %v93 = vld [vmem:[#allocation3 + $0x18] sm:$0xff]
    %v94 = vunpack.c.l.s8.bf16 %v90
    %v95 = vunpack.c.h.s8.bf16 %v90
    %v96 = vunpack.c.l.s8.bf16 %v91
    %v97 = vunpack.c.h.s8.bf16 %v91
    %v98 = vunpack.c.l.s8.bf16 %v92
    %v99 = vunpack.c.h.s8.bf16 %v92
    %v100 = vunpack.c.l.s8.bf16 %v93
    %v101 = vunpack.c.h.s8.bf16 %v93
    %s102 = sshra.s32 %s73, 3
    %s103 = sand.u32 %s73, 7
    %s104 = smul.addr %s102, 4
    %s105 = scalar_lea.vmem %s1, %s104
    %v106 = vld [vmem:[%s105] sm:$0xf]
    %v107 = vld [vmem:[%s105 + $0x4] sm:$0xf]
    %v108 = vld [vmem:[%s105 + $0x8] sm:$0xf]
    %v109 = vld [vmem:[%s105 + $0xc] sm:$0xf]
    %v110 = vld [vmem:[%s105 + $0x10] sm:$0xf]
    %v111 = vld [vmem:[%s105 + $0x14] sm:$0xf]
    %v112 = vld [vmem:[%s105 + $0x18] sm:$0xf]
    %v113 = vld [vmem:[%s105 + $0x1c] sm:$0xf]
    %v114 = vld [vmem:[%s105 + $0x20] sm:$0xf]
    %v115 = vld [vmem:[%s105 + $0x24] sm:$0xf]
    %v116 = vld [vmem:[%s105 + $0x28] sm:$0xf]
    %v117 = vld [vmem:[%s105 + $0x2c] sm:$0xf]
    %v118 = vld [vmem:[%s105 + $0x30] sm:$0xf]
    %v119 = vld [vmem:[%s105 + $0x34] sm:$0xf]
    %v120 = vld [vmem:[%s105 + $0x38] sm:$0xf]
    %v121 = vld [vmem:[%s105 + $0x3c] sm:$0xf]
    %v138 = vunpack.c.l.b16 %v106
    %v139 = vunpack.c.l.b16 %v107
    %v140 = vunpack.c.l.b16 %v108
    %v141 = vunpack.c.l.b16 %v109
    %v142 = vunpack.c.l.b16 %v110
    %v143 = vunpack.c.l.b16 %v111
    %v144 = vunpack.c.l.b16 %v112
    %v145 = vunpack.c.l.b16 %v113
    %v146 = vunpack.c.l.b16 %v114
    %v147 = vunpack.c.l.b16 %v115
    %v148 = vunpack.c.l.b16 %v116
    %v149 = vunpack.c.l.b16 %v117
    %v150 = vunpack.c.l.b16 %v118
    %v151 = vunpack.c.l.b16 %v119
    %v152 = vunpack.c.l.b16 %v120
    %v153 = vunpack.c.l.b16 %v121
    %v154 = vpack.c.b16 %v139, %v138
    %v155 = vpack.c.b16 %v141, %v140
    %v156 = vpack.c.b16 %v143, %v142
    %v157 = vpack.c.b16 %v145, %v144
    %v158 = vpack.c.b16 %v147, %v146
    %v159 = vpack.c.b16 %v149, %v148
    %v160 = vpack.c.b16 %v151, %v150
    %v161 = vpack.c.b16 %v153, %v152
    %170 = vmatprep.subr.bf16.mxu0 0
    %171 = vmatpush1.bf16.msra.mxu0 %v161
    %172 = vmatprep.subr.bf16.mxu0 0
    %173 = vmatpush1.bf16.msra.mxu0 %v160
    %174 = vmatprep.subr.bf16.mxu0 0
    %175 = vmatpush1.bf16.msra.mxu0 %v159
    %176 = vmatprep.subr.bf16.mxu0 0
    %177 = vmatpush1.bf16.msra.mxu0 %v158
    %178 = vmatprep.subr.bf16.mxu0 0
    %179 = vmatpush1.bf16.msra.mxu0 %v157
    %180 = vmatprep.subr.bf16.mxu0 0
    %181 = vmatpush1.bf16.msra.mxu0 %v156
    %182 = vmatprep.subr.bf16.mxu0 0
    %183 = vmatpush1.bf16.msra.mxu0 %v155
    %184 = vmatprep.subr.bf16.mxu0 0
    %185 = vmatpush1.bf16.msra.mxu0 %v154
    %186 = vmatprep.subr.bf16.mxu0 0
    %187 = vmatpush2.bf16.msra.mxu0 0
    %188 = vmatprep.subr.bf16.mxu0 0
    %189 = vmatpush2.bf16.msra.mxu0 0
    %190 = vmatprep.subr.bf16.mxu0 0
    %191 = vmatpush2.bf16.msra.mxu0 0
    %192 = vmatprep.subr.bf16.mxu0 0
    %193 = vmatpush2.bf16.msra.mxu0 0
    %194 = vmatprep.subr.bf16.mxu0 0
    %195 = vmatpush2.bf16.msra.mxu0 0
    %196 = vmatprep.subr.bf16.mxu0 0
    %197 = vmatpush2.bf16.msra.mxu0 0
    %198 = vmatprep.subr.bf16.mxu0 0
    %199 = vmatpush2.bf16.msra.mxu0 0
    %200 = vmatprep.subr.bf16.mxu0 0
    %201 = vmatpush2.bf16.msra.mxu0 0
    %202 = vmatprep.mubr.bf16.mxu0 0
    %203 = vmatmul.mubr.bf16.gmra.mxu0 %v94
    %v204 = vpop.f32.mrf.mxu0
    %v205 = vadd.f32 0.0, %v204
    %v206 = vpop.f32.mrf.mxu0
    %v207 = vpop.f32.mrf.mxu0
    %v208 = vadd.f32 0.0, %v207
    %v209 = vpop.f32.mrf.mxu0
    %210 = vmatprep.mubr.bf16.mxu0 0
    %211 = vmatmul.mubr.bf16.gmra.mxu0 %v95
    %v212 = vpop.f32.mrf.mxu0
    %v213 = vadd.f32 0.0, %v212
    %v214 = vpop.f32.mrf.mxu0
    %v215 = vpop.f32.mrf.mxu0
    %v216 = vadd.f32 0.0, %v215
    %v217 = vpop.f32.mrf.mxu0
    %218 = vmatprep.mubr.bf16.mxu0 0
    %219 = vmatmul.mubr.bf16.gmra.mxu0 %v96
    %v220 = vpop.f32.mrf.mxu0
    %v221 = vadd.f32 0.0, %v220
    %v222 = vpop.f32.mrf.mxu0
    %v223 = vpop.f32.mrf.mxu0
    %v224 = vadd.f32 0.0, %v223
    %v225 = vpop.f32.mrf.mxu0
    %226 = vmatprep.mubr.bf16.mxu0 0
    %227 = vmatmul.mubr.bf16.gmra.mxu0 %v97
    %v228 = vpop.f32.mrf.mxu0
    %v229 = vadd.f32 0.0, %v228
    %v230 = vpop.f32.mrf.mxu0
    %v231 = vpop.f32.mrf.mxu0
    %v232 = vadd.f32 0.0, %v231
    %v233 = vpop.f32.mrf.mxu0
    %234 = vmatprep.mubr.bf16.mxu0 0
    %235 = vmatmul.mubr.bf16.gmra.mxu0 %v98
    %v236 = vpop.f32.mrf.mxu0
    %v237 = vadd.f32 0.0, %v236
    %v238 = vpop.f32.mrf.mxu0
    %v239 = vpop.f32.mrf.mxu0
    %v240 = vadd.f32 0.0, %v239
    %v241 = vpop.f32.mrf.mxu0
    %242 = vmatprep.mubr.bf16.mxu0 0
    %243 = vmatmul.mubr.bf16.gmra.mxu0 %v99
    %v244 = vpop.f32.mrf.mxu0
    %v245 = vadd.f32 0.0, %v244
    %v246 = vpop.f32.mrf.mxu0
    %v247 = vpop.f32.mrf.mxu0
    %v248 = vadd.f32 0.0, %v247
    %v249 = vpop.f32.mrf.mxu0
    %250 = vmatprep.mubr.bf16.mxu0 0
    %251 = vmatmul.mubr.bf16.gmra.mxu0 %v100
    %v252 = vpop.f32.mrf.mxu0
    %v253 = vadd.f32 0.0, %v252
    %v254 = vpop.f32.mrf.mxu0
    %v255 = vpop.f32.mrf.mxu0
    %v256 = vadd.f32 0.0, %v255
    %v257 = vpop.f32.mrf.mxu0
    %258 = vmatprep.mubr.bf16.mxu0 0
    %259 = vmatmul.mubr.bf16.gmra.mxu0 %v101
    %v260 = vpop.f32.mrf.mxu0
    %v261 = vadd.f32 0.0, %v260
    %v262 = vpop.f32.mrf.mxu0
    %v263 = vpop.f32.mrf.mxu0
    %v264 = vadd.f32 0.0, %v263
    %v265 = vpop.f32.mrf.mxu0
    %266 = vdwg.mxu0
    %v267 = vadd.f32 %v74, %v205
    %v268 = vadd.f32 %v75, %v208
    %v269 = vadd.f32 %v76, %v213
    %v270 = vadd.f32 %v77, %v216
    %v271 = vadd.f32 %v78, %v221
    %v272 = vadd.f32 %v79, %v224
    %v273 = vadd.f32 %v80, %v229
    %v274 = vadd.f32 %v81, %v232
    %v275 = vadd.f32 %v82, %v237
    %v276 = vadd.f32 %v83, %v240
    %v277 = vadd.f32 %v84, %v245
    %v278 = vadd.f32 %v85, %v248
    %v279 = vadd.f32 %v86, %v253
    %v280 = vadd.f32 %v87, %v256
    %v281 = vadd.f32 %v88, %v261
    %v282 = vadd.f32 %v89, %v264
    %283 = vst [vmem:[#allocation2] sm:$0xff] %v267
    %284 = vst [vmem:[#allocation2 + $0x8] sm:$0xff] %v268
    %285 = vst [vmem:[#allocation2 + $0x10] sm:$0xff] %v269
    %286 = vst [vmem:[#allocation2 + $0x18] sm:$0xff] %v270
    %287 = vst [vmem:[#allocation2 + $0x20] sm:$0xff] %v271
    %288 = vst [vmem:[#allocation2 + $0x28] sm:$0xff] %v272
    %289 = vst [vmem:[#allocation2 + $0x30] sm:$0xff] %v273
    %290 = vst [vmem:[#allocation2 + $0x38] sm:$0xff] %v274
    %291 = vst [vmem:[#allocation2 + $0x40] sm:$0xff] %v275
    %292 = vst [vmem:[#allocation2 + $0x48] sm:$0xff] %v276
    %293 = vst [vmem:[#allocation2 + $0x50] sm:$0xff] %v277
    %294 = vst [vmem:[#allocation2 + $0x58] sm:$0xff] %v278
    %295 = vst [vmem:[#allocation2 + $0x60] sm:$0xff] %v279
    %296 = vst [vmem:[#allocation2 + $0x68] sm:$0xff] %v280
    %297 = vst [vmem:[#allocation2 + $0x70] sm:$0xff] %v281
    %298 = vst [vmem:[#allocation2 + $0x78] sm:$0xff] %v282
    // Predicated region
    $region38: #{tpu_custom_call.1} parent=1 // pred_check
      %p299 = pneg %p53
    $region39: #{tpu_custom_call.1} parent=1 // pred_check_branch
      %301 = sbr.rel (%p299) target = $region41
    $region40: #{tpu_custom_call.1} parent=1 // pred_region
      %s302 = smul.u32 0, 128
      %v303 = vld [vmem:[#allocation2] sm:$0xff]
      %v304 = vld [vmem:[#allocation2 + $0x8] sm:$0xff]
      %v305 = vld [vmem:[#allocation2 + $0x10] sm:$0xff]
      %v306 = vld [vmem:[#allocation2 + $0x18] sm:$0xff]
      %v307 = vld [vmem:[#allocation2 + $0x20] sm:$0xff]
      %v308 = vld [vmem:[#allocation2 + $0x28] sm:$0xff]
      %v309 = vld [vmem:[#allocation2 + $0x30] sm:$0xff]
      %v310 = vld [vmem:[#allocation2 + $0x38] sm:$0xff]
      %v311 = vld [vmem:[#allocation2 + $0x40] sm:$0xff]
      %v312 = vld [vmem:[#allocation2 + $0x48] sm:$0xff]
      %v313 = vld [vmem:[#allocation2 + $0x50] sm:$0xff]
      %v314 = vld [vmem:[#allocation2 + $0x58] sm:$0xff]
      %v315 = vld [vmem:[#allocation2 + $0x60] sm:$0xff]
      %v316 = vld [vmem:[#allocation2 + $0x68] sm:$0xff]
      %v317 = vld [vmem:[#allocation2 + $0x70] sm:$0xff]
      %v318 = vld [vmem:[#allocation2 + $0x78] sm:$0xff]
      %v319 = vld [vmem:[%s2] sm:$0xff]
      %v320 = vld [vmem:[%s2 + $0x8] sm:$0xff]
      %v321 = vld [vmem:[%s2 + $0x10] sm:$0xff]
      %v322 = vld [vmem:[%s2 + $0x18] sm:$0xff]
      %v323 = vld [vmem:[%s2 + $0x20] sm:$0xff]
      %v324 = vld [vmem:[%s2 + $0x28] sm:$0xff]
      %v325 = vld [vmem:[%s2 + $0x30] sm:$0xff]
      %v326 = vld [vmem:[%s2 + $0x38] sm:$0xff]
      %v327 = vld [vmem:[%s2 + $0x40] sm:$0xff]
      %v328 = vld [vmem:[%s2 + $0x48] sm:$0xff]
      %v329 = vld [vmem:[%s2 + $0x50] sm:$0xff]
      %v330 = vld [vmem:[%s2 + $0x58] sm:$0xff]
      %v331 = vld [vmem:[%s2 + $0x60] sm:$0xff]
      %v332 = vld [vmem:[%s2 + $0x68] sm:$0xff]
      %v333 = vld [vmem:[%s2 + $0x70] sm:$0xff]
      %v334 = vld [vmem:[%s2 + $0x78] sm:$0xff]
      %336 = vset.pattern.permute.xlu0 0
      %337 = vperm.xlu0 %336, %v319
      %v338 = vpop.permute.xlu0 %337
      %341 = vset.pattern.permute.xlu0 0
      %342 = vperm.xlu0 %341, %v320
      %v343 = vpop.permute.xlu0 %342
      %346 = vset.pattern.permute.xlu0 0
      %347 = vperm.xlu0 %346, %v321
      %v348 = vpop.permute.xlu0 %347
      %351 = vset.pattern.permute.xlu0 0
      %352 = vperm.xlu0 %351, %v322
      %v353 = vpop.permute.xlu0 %352
      %356 = vset.pattern.permute.xlu0 0
      %357 = vperm.xlu0 %356, %v323
      %v358 = vpop.permute.xlu0 %357
      %361 = vset.pattern.permute.xlu0 0
      %362 = vperm.xlu0 %361, %v324
      %v363 = vpop.permute.xlu0 %362
      %366 = vset.pattern.permute.xlu0 0
      %367 = vperm.xlu0 %366, %v325
      %v368 = vpop.permute.xlu0 %367
      %371 = vset.pattern.permute.xlu0 0
      %372 = vperm.xlu0 %371, %v326
      %v373 = vpop.permute.xlu0 %372
      %376 = vset.pattern.permute.xlu0 0
      %377 = vperm.xlu0 %376, %v327
      %v378 = vpop.permute.xlu0 %377
      %381 = vset.pattern.permute.xlu0 0
      %382 = vperm.xlu0 %381, %v328
      %v383 = vpop.permute.xlu0 %382
      %386 = vset.pattern.permute.xlu0 0
      %387 = vperm.xlu0 %386, %v329
      %v388 = vpop.permute.xlu0 %387
      %391 = vset.pattern.permute.xlu0 0
      %392 = vperm.xlu0 %391, %v330
      %v393 = vpop.permute.xlu0 %392
      %396 = vset.pattern.permute.xlu0 0
      %397 = vperm.xlu0 %396, %v331
      %v398 = vpop.permute.xlu0 %397
      %401 = vset.pattern.permute.xlu0 0
      %402 = vperm.xlu0 %401, %v332
      %v403 = vpop.permute.xlu0 %402
      %406 = vset.pattern.permute.xlu0 0
      %407 = vperm.xlu0 %406, %v333
      %v408 = vpop.permute.xlu0 %407
      %411 = vset.pattern.permute.xlu0 0
      %412 = vperm.xlu0 %411, %v334
      %v413 = vpop.permute.xlu0 %412
      %v415 = vmul.f32 %v303, %v338
      %v416 = vmul.f32 %v304, %v343
      %v417 = vmul.f32 %v305, %v348
      %v418 = vmul.f32 %v306, %v353
      %v419 = vmul.f32 %v307, %v358
      %v420 = vmul.f32 %v308, %v363
      %v421 = vmul.f32 %v309, %v368
      %v422 = vmul.f32 %v310, %v373
      %v423 = vmul.f32 %v311, %v378
      %v424 = vmul.f32 %v312, %v383
      %v425 = vmul.f32 %v313, %v388
      %v426 = vmul.f32 %v314, %v393
      %v427 = vmul.f32 %v315, %v398
      %v428 = vmul.f32 %v316, %v403
      %v429 = vmul.f32 %v317, %v408
      %v430 = vmul.f32 %v318, %v413
      %v431 = vpack.c.bf16 %v416, %v415
      %v432 = vpack.c.bf16 %v418, %v417
      %v433 = vpack.c.bf16 %v420, %v419
      %v434 = vpack.c.bf16 %v422, %v421
      %v435 = vpack.c.bf16 %v424, %v423
      %v436 = vpack.c.bf16 %v426, %v425
      %v437 = vpack.c.bf16 %v428, %v427
      %v438 = vpack.c.bf16 %v430, %v429
      %v439 = vld [vmem:[%s3] sm:$0xf]
      %v440 = vld [vmem:[%s3 + $0x4] sm:$0xf]
      %v441 = vld [vmem:[%s3 + $0x8] sm:$0xf]
      %v442 = vld [vmem:[%s3 + $0xc] sm:$0xf]
      %v443 = vld [vmem:[%s3 + $0x10] sm:$0xf]
      %v444 = vld [vmem:[%s3 + $0x14] sm:$0xf]
      %v445 = vld [vmem:[%s3 + $0x18] sm:$0xf]
      %v446 = vld [vmem:[%s3 + $0x1c] sm:$0xf]
      %v447 = vld [vmem:[%s3 + $0x20] sm:$0xf]
      %v448 = vld [vmem:[%s3 + $0x24] sm:$0xf]
      %v449 = vld [vmem:[%s3 + $0x28] sm:$0xf]
      %v450 = vld [vmem:[%s3 + $0x2c] sm:$0xf]
      %v451 = vld [vmem:[%s3 + $0x30] sm:$0xf]
      %v452 = vld [vmem:[%s3 + $0x34] sm:$0xf]
      %v453 = vld [vmem:[%s3 + $0x38] sm:$0xf]
      %v454 = vld [vmem:[%s3 + $0x3c] sm:$0xf]
      %s455 = sshra.s32 %s302, 3
      %s456 = sand.u32 %s302, 7
      %s457 = smul.addr %s455, 4
      %s458 = scalar_lea.vmem %s1, %s457
      %v459 = vld [vmem:[%s458] sm:$0xf]
      %v460 = vld [vmem:[%s458 + $0x4] sm:$0xf]
      %v461 = vld [vmem:[%s458 + $0x8] sm:$0xf]
      %v462 = vld [vmem:[%s458 + $0xc] sm:$0xf]
      %v463 = vld [vmem:[%s458 + $0x10] sm:$0xf]
      %v464 = vld [vmem:[%s458 + $0x14] sm:$0xf]
      %v465 = vld [vmem:[%s458 + $0x18] sm:$0xf]
      %v466 = vld [vmem:[%s458 + $0x1c] sm:$0xf]
      %v467 = vld [vmem:[%s458 + $0x20] sm:$0xf]
      %v468 = vld [vmem:[%s458 + $0x24] sm:$0xf]
      %v469 = vld [vmem:[%s458 + $0x28] sm:$0xf]
      %v470 = vld [vmem:[%s458 + $0x2c] sm:$0xf]
      %v471 = vld [vmem:[%s458 + $0x30] sm:$0xf]
      %v472 = vld [vmem:[%s458 + $0x34] sm:$0xf]
      %v473 = vld [vmem:[%s458 + $0x38] sm:$0xf]
      %v474 = vld [vmem:[%s458 + $0x3c] sm:$0xf]
      %v475 = vld [vmem:[#allocation6] sm:$0xf]
      %v476 = vld [vmem:[#allocation6 + $0x4] sm:$0xf]
      %v477 = vld [vmem:[#allocation6 + $0x8] sm:$0xf]
      %v478 = vld [vmem:[#allocation6 + $0xc] sm:$0xf]
      %v479 = vld [vmem:[#allocation6 + $0x10] sm:$0xf]
      %v480 = vld [vmem:[#allocation6 + $0x14] sm:$0xf]
      %v481 = vld [vmem:[#allocation6 + $0x18] sm:$0xf]
      %v482 = vld [vmem:[#allocation6 + $0x1c] sm:$0xf]
      %v483 = vld [vmem:[#allocation6 + $0x20] sm:$0xf]
      %v484 = vld [vmem:[#allocation6 + $0x24] sm:$0xf]
      %v485 = vld [vmem:[#allocation6 + $0x28] sm:$0xf]
      %v486 = vld [vmem:[#allocation6 + $0x2c] sm:$0xf]
      %v487 = vld [vmem:[#allocation6 + $0x30] sm:$0xf]
      %v488 = vld [vmem:[#allocation6 + $0x34] sm:$0xf]
      %v489 = vld [vmem:[#allocation6 + $0x38] sm:$0xf]
      %v490 = vld [vmem:[#allocation6 + $0x3c] sm:$0xf]
      %v507 = vunpack.c.l.b16 %v459
      %v508 = vunpack.c.l.b16 %v460
      %v509 = vunpack.c.l.b16 %v461
      %v510 = vunpack.c.l.b16 %v462
      %v511 = vunpack.c.l.b16 %v463
      %v512 = vunpack.c.l.b16 %v464
      %v513 = vunpack.c.l.b16 %v465
      %v514 = vunpack.c.l.b16 %v466
      %v515 = vunpack.c.l.b16 %v467
      %v516 = vunpack.c.l.b16 %v468
      %v517 = vunpack.c.l.b16 %v469
      %v518 = vunpack.c.l.b16 %v470
      %v519 = vunpack.c.l.b16 %v471
      %v520 = vunpack.c.l.b16 %v472
      %v521 = vunpack.c.l.b16 %v473
      %v522 = vunpack.c.l.b16 %v474
      %v523 = vpack.c.b16 %v508, %v507
      %v524 = vpack.c.b16 %v510, %v509
      %v525 = vpack.c.b16 %v512, %v511
      %v526 = vpack.c.b16 %v514, %v513
      %v527 = vpack.c.b16 %v516, %v515
      %v528 = vpack.c.b16 %v518, %v517
      %v529 = vpack.c.b16 %v520, %v519
      %v530 = vpack.c.b16 %v522, %v521
      %v555 = vunpack.c.l.b16 %v475
      %v556 = vunpack.c.l.b16 %v476
      %v557 = vunpack.c.l.b16 %v477
      %v558 = vunpack.c.l.b16 %v478
      %v559 = vunpack.c.l.b16 %v479
      %v560 = vunpack.c.l.b16 %v480
      %v561 = vunpack.c.l.b16 %v481
      %v562 = vunpack.c.l.b16 %v482
      %v563 = vunpack.c.l.b16 %v483
      %v564 = vunpack.c.l.b16 %v484
      %v565 = vunpack.c.l.b16 %v485
      %v566 = vunpack.c.l.b16 %v486
      %v567 = vunpack.c.l.b16 %v487
      %v568 = vunpack.c.l.b16 %v488
      %v569 = vunpack.c.l.b16 %v489
      %v570 = vunpack.c.l.b16 %v490
      %v571 = vpack.c.b16 %v556, %v555
      %v572 = vpack.c.b16 %v558, %v557
      %v573 = vpack.c.b16 %v560, %v559
      %v574 = vpack.c.b16 %v562, %v561
      %v575 = vpack.c.b16 %v564, %v563
      %v576 = vpack.c.b16 %v566, %v565
      %v577 = vpack.c.b16 %v568, %v567
      %v578 = vpack.c.b16 %v570, %v569
      %587 = vmatprep.subr.bf16.mxu0 0
      %588 = vmatpush1.bf16.msra.mxu0 %v578
      %589 = vmatprep.subr.bf16.mxu0 0
      %590 = vmatpush1.bf16.msra.mxu0 %v577
      %591 = vmatprep.subr.bf16.mxu0 0
      %592 = vmatpush1.bf16.msra.mxu0 %v576
      %593 = vmatprep.subr.bf16.mxu0 0
      %594 = vmatpush1.bf16.msra.mxu0 %v575
      %595 = vmatprep.subr.bf16.mxu0 0
      %596 = vmatpush1.bf16.msra.mxu0 %v574
      %597 = vmatprep.subr.bf16.mxu0 0
      %598 = vmatpush1.bf16.msra.mxu0 %v573
      %599 = vmatprep.subr.bf16.mxu0 0
      %600 = vmatpush1.bf16.msra.mxu0 %v572
      %601 = vmatprep.subr.bf16.mxu0 0
      %602 = vmatpush1.bf16.msra.mxu0 %v571
      %603 = vmatprep.subr.bf16.mxu0 0
      %604 = vmatpush2.bf16.msra.mxu0 0
      %605 = vmatprep.subr.bf16.mxu0 0
      %606 = vmatpush2.bf16.msra.mxu0 0
      %607 = vmatprep.subr.bf16.mxu0 0
      %608 = vmatpush2.bf16.msra.mxu0 0
      %609 = vmatprep.subr.bf16.mxu0 0
      %610 = vmatpush2.bf16.msra.mxu0 0
      %611 = vmatprep.subr.bf16.mxu0 0
      %612 = vmatpush2.bf16.msra.mxu0 0
      %613 = vmatprep.subr.bf16.mxu0 0
      %614 = vmatpush2.bf16.msra.mxu0 0
      %615 = vmatprep.subr.bf16.mxu0 0
      %616 = vmatpush2.bf16.msra.mxu0 0
      %617 = vmatprep.subr.bf16.mxu0 0
      %618 = vmatpush2.bf16.msra.mxu0 0
      %619 = vmatprep.mubr.bf16.mxu0 0
      %620 = vmatmul.mubr.bf16.gmra.mxu0 %v523
      %v621 = vpop.f32.mrf.mxu0
      %v622 = vadd.f32 0.0, %v621
      %v623 = vpop.f32.mrf.mxu0
      %v624 = vpop.f32.mrf.mxu0
      %v625 = vadd.f32 0.0, %v624
      %v626 = vpop.f32.mrf.mxu0
      %627 = vmatprep.mubr.bf16.mxu0 0
      %628 = vmatmul.mubr.bf16.gmra.mxu0 %v524
      %v629 = vpop.f32.mrf.mxu0
      %v630 = vadd.f32 0.0, %v629
      %v631 = vpop.f32.mrf.mxu0
      %v632 = vpop.f32.mrf.mxu0
      %v633 = vadd.f32 0.0, %v632
      %v634 = vpop.f32.mrf.mxu0
      %635 = vmatprep.mubr.bf16.mxu0 0
      %636 = vmatmul.mubr.bf16.gmra.mxu0 %v525
      %v637 = vpop.f32.mrf.mxu0
      %v638 = vadd.f32 0.0, %v637
      %v639 = vpop.f32.mrf.mxu0
      %v640 = vpop.f32.mrf.mxu0
      %v641 = vadd.f32 0.0, %v640
      %v642 = vpop.f32.mrf.mxu0
      %643 = vmatprep.mubr.bf16.mxu0 0
      %644 = vmatmul.mubr.bf16.gmra.mxu0 %v526
      %v645 = vpop.f32.mrf.mxu0
      %v646 = vadd.f32 0.0, %v645
      %v647 = vpop.f32.mrf.mxu0
      %v648 = vpop.f32.mrf.mxu0
      %v649 = vadd.f32 0.0, %v648
      %v650 = vpop.f32.mrf.mxu0
      %651 = vmatprep.mubr.bf16.mxu0 0
      %652 = vmatmul.mubr.bf16.gmra.mxu0 %v527
      %v653 = vpop.f32.mrf.mxu0
      %v654 = vadd.f32 0.0, %v653
      %v655 = vpop.f32.mrf.mxu0
      %v656 = vpop.f32.mrf.mxu0
      %v657 = vadd.f32 0.0, %v656
      %v658 = vpop.f32.mrf.mxu0
      %659 = vmatprep.mubr.bf16.mxu0 0
      %660 = vmatmul.mubr.bf16.gmra.mxu0 %v528
      %v661 = vpop.f32.mrf.mxu0
      %v662 = vadd.f32 0.0, %v661
      %v663 = vpop.f32.mrf.mxu0
      %v664 = vpop.f32.mrf.mxu0
      %v665 = vadd.f32 0.0, %v664
      %v666 = vpop.f32.mrf.mxu0
      %667 = vmatprep.mubr.bf16.mxu0 0
      %668 = vmatmul.mubr.bf16.gmra.mxu0 %v529
      %v669 = vpop.f32.mrf.mxu0
      %v670 = vadd.f32 0.0, %v669
      %v671 = vpop.f32.mrf.mxu0
      %v672 = vpop.f32.mrf.mxu0
      %v673 = vadd.f32 0.0, %v672
      %v674 = vpop.f32.mrf.mxu0
      %675 = vmatprep.mubr.bf16.mxu0 0
      %676 = vmatmul.mubr.bf16.gmra.mxu0 %v530
      %v677 = vpop.f32.mrf.mxu0
      %v678 = vadd.f32 0.0, %v677
      %v679 = vpop.f32.mrf.mxu0
      %v680 = vpop.f32.mrf.mxu0
      %v681 = vadd.f32 0.0, %v680
      %v682 = vpop.f32.mrf.mxu0
      %683 = vdwg.mxu0
      %v700 = vunpack.c.l.b16 %v439
      %v701 = vunpack.c.l.b16 %v440
      %v702 = vunpack.c.l.b16 %v441
      %v703 = vunpack.c.l.b16 %v442
      %v704 = vunpack.c.l.b16 %v443
      %v705 = vunpack.c.l.b16 %v444
      %v706 = vunpack.c.l.b16 %v445
      %v707 = vunpack.c.l.b16 %v446
      %v708 = vunpack.c.l.b16 %v447
      %v709 = vunpack.c.l.b16 %v448
      %v710 = vunpack.c.l.b16 %v449
      %v711 = vunpack.c.l.b16 %v450
      %v712 = vunpack.c.l.b16 %v451
      %v713 = vunpack.c.l.b16 %v452
      %v714 = vunpack.c.l.b16 %v453
      %v715 = vunpack.c.l.b16 %v454
      %v716 = vpack.c.b16 %v701, %v700
      %v717 = vpack.c.b16 %v703, %v702
      %v718 = vpack.c.b16 %v705, %v704
      %v719 = vpack.c.b16 %v707, %v706
      %v720 = vpack.c.b16 %v709, %v708
      %v721 = vpack.c.b16 %v711, %v710
      %v722 = vpack.c.b16 %v713, %v712
      %v723 = vpack.c.b16 %v715, %v714
      %732 = vmatprep.subr.bf16.mxu0 0
      %733 = vmatpush1.bf16.msra.mxu0 %v723
      %734 = vmatprep.subr.bf16.mxu0 0
      %735 = vmatpush1.bf16.msra.mxu0 %v722
      %736 = vmatprep.subr.bf16.mxu0 0
      %737 = vmatpush1.bf16.msra.mxu0 %v721
      %738 = vmatprep.subr.bf16.mxu0 0
      %739 = vmatpush1.bf16.msra.mxu0 %v720
      %740 = vmatprep.subr.bf16.mxu0 0
      %741 = vmatpush1.bf16.msra.mxu0 %v719
      %742 = vmatprep.subr.bf16.mxu0 0
      %743 = vmatpush1.bf16.msra.mxu0 %v718
      %744 = vmatprep.subr.bf16.mxu0 0
      %745 = vmatpush1.bf16.msra.mxu0 %v717
      %746 = vmatprep.subr.bf16.mxu0 0
      %747 = vmatpush1.bf16.msra.mxu0 %v716
      %748 = vmatprep.subr.bf16.mxu0 0
      %749 = vmatpush2.bf16.msra.mxu0 0
      %750 = vmatprep.subr.bf16.mxu0 0
      %751 = vmatpush2.bf16.msra.mxu0 0
      %752 = vmatprep.subr.bf16.mxu0 0
      %753 = vmatpush2.bf16.msra.mxu0 0
      %754 = vmatprep.subr.bf16.mxu0 0
      %755 = vmatpush2.bf16.msra.mxu0 0
      %756 = vmatprep.subr.bf16.mxu0 0
      %757 = vmatpush2.bf16.msra.mxu0 0
      %758 = vmatprep.subr.bf16.mxu0 0
      %759 = vmatpush2.bf16.msra.mxu0 0
      %760 = vmatprep.subr.bf16.mxu0 0
      %761 = vmatpush2.bf16.msra.mxu0 0
      %762 = vmatprep.subr.bf16.mxu0 0
      %763 = vmatpush2.bf16.msra.mxu0 0
      %764 = vmatprep.mubr.bf16.mxu0 0
      %765 = vmatmul.mubr.bf16.gmra.mxu0 %v431
      %v766 = vpop.f32.mrf.mxu0
      %v767 = vadd.f32 %v622, %v766
      %v768 = vpop.f32.mrf.mxu0
      %v769 = vpop.f32.mrf.mxu0
      %v770 = vadd.f32 %v625, %v769
      %v771 = vpop.f32.mrf.mxu0
      %772 = vmatprep.mubr.bf16.mxu0 0
      %773 = vmatmul.mubr.bf16.gmra.mxu0 %v432
      %v774 = vpop.f32.mrf.mxu0
      %v775 = vadd.f32 %v630, %v774
      %v776 = vpop.f32.mrf.mxu0
      %v777 = vpop.f32.mrf.mxu0
      %v778 = vadd.f32 %v633, %v777
      %v779 = vpop.f32.mrf.mxu0
      %780 = vmatprep.mubr.bf16.mxu0 0
      %781 = vmatmul.mubr.bf16.gmra.mxu0 %v433
      %v782 = vpop.f32.mrf.mxu0
      %v783 = vadd.f32 %v638, %v782
      %v784 = vpop.f32.mrf.mxu0
      %v785 = vpop.f32.mrf.mxu0
      %v786 = vadd.f32 %v641, %v785
      %v787 = vpop.f32.mrf.mxu0
      %788 = vmatprep.mubr.bf16.mxu0 0
      %789 = vmatmul.mubr.bf16.gmra.mxu0 %v434
      %v790 = vpop.f32.mrf.mxu0
      %v791 = vadd.f32 %v646, %v790
      %v792 = vpop.f32.mrf.mxu0
      %v793 = vpop.f32.mrf.mxu0
      %v794 = vadd.f32 %v649, %v793
      %v795 = vpop.f32.mrf.mxu0
      %796 = vmatprep.mubr.bf16.mxu0 0
      %797 = vmatmul.mubr.bf16.gmra.mxu0 %v435
      %v798 = vpop.f32.mrf.mxu0
      %v799 = vadd.f32 %v654, %v798
      %v800 = vpop.f32.mrf.mxu0
      %v801 = vpop.f32.mrf.mxu0
      %v802 = vadd.f32 %v657, %v801
      %v803 = vpop.f32.mrf.mxu0
      %804 = vmatprep.mubr.bf16.mxu0 0
      %805 = vmatmul.mubr.bf16.gmra.mxu0 %v436
      %v806 = vpop.f32.mrf.mxu0
      %v807 = vadd.f32 %v662, %v806
      %v808 = vpop.f32.mrf.mxu0
      %v809 = vpop.f32.mrf.mxu0
      %v810 = vadd.f32 %v665, %v809
      %v811 = vpop.f32.mrf.mxu0
      %812 = vmatprep.mubr.bf16.mxu0 0
      %813 = vmatmul.mubr.bf16.gmra.mxu0 %v437
      %v814 = vpop.f32.mrf.mxu0
      %v815 = vadd.f32 %v670, %v814
      %v816 = vpop.f32.mrf.mxu0
      %v817 = vpop.f32.mrf.mxu0
      %v818 = vadd.f32 %v673, %v817
      %v819 = vpop.f32.mrf.mxu0
      %820 = vmatprep.mubr.bf16.mxu0 0
      %821 = vmatmul.mubr.bf16.gmra.mxu0 %v438
      %v822 = vpop.f32.mrf.mxu0
      %v823 = vadd.f32 %v678, %v822
      %v824 = vpop.f32.mrf.mxu0
      %v825 = vpop.f32.mrf.mxu0
      %v826 = vadd.f32 %v681, %v825
      %v827 = vpop.f32.mrf.mxu0
      %828 = vdwg.mxu0
      %v829 = vld [vmem:[%s5] sm:$0x1]
      %v831 = vlaneseq
      %v832 = vshrl.u32 %v831, 7
      %v833 = vsub.s32 0, %v832
      %v834 = vrot.slane %v829, %v833
      %v836 = vadd.f32 %v767, %v834
      %v837 = vadd.f32 %v770, %v834
      %v838 = vadd.f32 %v775, %v834
      %v839 = vadd.f32 %v778, %v834
      %v840 = vadd.f32 %v783, %v834
      %v841 = vadd.f32 %v786, %v834
      %v842 = vadd.f32 %v791, %v834
      %v843 = vadd.f32 %v794, %v834
      %v844 = vadd.f32 %v799, %v834
      %v845 = vadd.f32 %v802, %v834
      %v846 = vadd.f32 %v807, %v834
      %v847 = vadd.f32 %v810, %v834
      %v848 = vadd.f32 %v815, %v834
      %v849 = vadd.f32 %v818, %v834
      %v850 = vadd.f32 %v823, %v834
      %v851 = vadd.f32 %v826, %v834
      %v852 = vmax.f32 %v836, 0.0
      %v853 = vmax.f32 %v837, 0.0
      %v854 = vmax.f32 %v838, 0.0
      %v855 = vmax.f32 %v839, 0.0
      %v856 = vmax.f32 %v840, 0.0
      %v857 = vmax.f32 %v841, 0.0
      %v858 = vmax.f32 %v842, 0.0
      %v859 = vmax.f32 %v843, 0.0
      %v860 = vmax.f32 %v844, 0.0
      %v861 = vmax.f32 %v845, 0.0
      %v862 = vmax.f32 %v846, 0.0
      %v863 = vmax.f32 %v847, 0.0
      %v864 = vmax.f32 %v848, 0.0
      %v865 = vmax.f32 %v849, 0.0
      %v866 = vmax.f32 %v850, 0.0
      %v867 = vmax.f32 %v851, 0.0
      %v868 = vlaneseq
      %v869 = vshrl.u32 %v868, 7
      %v870 = vadd.s32 %v869, 8
      %v871 = vadd.s32 %v869, 16
      %v872 = vadd.s32 %v869, 24
      %v873 = vadd.s32 %v869, 32
      %v874 = vadd.s32 %v869, 40
      %v875 = vadd.s32 %v869, 48
      %v876 = vadd.s32 %v869, 56
      %v877 = vadd.s32 %v869, 64
      %v878 = vadd.s32 %v869, 72
      %v879 = vadd.s32 %v869, 80
      %v880 = vadd.s32 %v869, 88
      %v881 = vadd.s32 %v869, 96
      %v882 = vadd.s32 %v869, 104
      %v883 = vadd.s32 %v869, 112
      %v884 = vadd.s32 %v869, 120
      %v885 = vstv %s302
      %v886 = vadd.s32 %v885, %v869
      %v887 = vadd.s32 %v885, %v870
      %v888 = vadd.s32 %v885, %v871
      %v889 = vadd.s32 %v885, %v872
      %v890 = vadd.s32 %v885, %v873
      %v891 = vadd.s32 %v885, %v874
      %v892 = vadd.s32 %v885, %v875
      %v893 = vadd.s32 %v885, %v876
      %v894 = vadd.s32 %v885, %v877
      %v895 = vadd.s32 %v885, %v878
      %v896 = vadd.s32 %v885, %v879
      %v897 = vadd.s32 %v885, %v880
      %v898 = vadd.s32 %v885, %v881
      %v899 = vadd.s32 %v885, %v882
      %v900 = vadd.s32 %v885, %v883
      %v901 = vadd.s32 %v885, %v884
      %vm902 = vcmp.lt.s32.totalorder %v886, 16
      %vm903 = vcmp.lt.s32.totalorder %v887, 16
      %vm904 = vcmp.lt.s32.totalorder %v888, 16
      %vm905 = vcmp.lt.s32.totalorder %v889, 16
      %vm906 = vcmp.lt.s32.totalorder %v890, 16
      %vm907 = vcmp.lt.s32.totalorder %v891, 16
      %vm908 = vcmp.lt.s32.totalorder %v892, 16
      %vm909 = vcmp.lt.s32.totalorder %v893, 16
      %vm910 = vcmp.lt.s32.totalorder %v894, 16
      %vm911 = vcmp.lt.s32.totalorder %v895, 16
      %vm912 = vcmp.lt.s32.totalorder %v896, 16
      %vm913 = vcmp.lt.s32.totalorder %v897, 16
      %vm914 = vcmp.lt.s32.totalorder %v898, 16
      %vm915 = vcmp.lt.s32.totalorder %v899, 16
      %vm916 = vcmp.lt.s32.totalorder %v900, 16
      %vm917 = vcmp.lt.s32.totalorder %v901, 16
      %v918 = vsel %vm902, 1, 0
      %v919 = vsel %vm903, 1, 0
      %v920 = vsel %vm904, 1, 0
      %v921 = vsel %vm905, 1, 0
      %v922 = vsel %vm906, 1, 0
      %v923 = vsel %vm907, 1, 0
      %v924 = vsel %vm908, 1, 0
      %v925 = vsel %vm909, 1, 0
      %v926 = vsel %vm910, 1, 0
      %v927 = vsel %vm911, 1, 0
      %v928 = vsel %vm912, 1, 0
      %v929 = vsel %vm913, 1, 0
      %v930 = vsel %vm914, 1, 0
      %v931 = vsel %vm915, 1, 0
      %v932 = vsel %vm916, 1, 0
      %v933 = vsel %vm917, 1, 0
      %vm934 = vcmp.eq.s32.totalorder %v918, 1
      %vm935 = vcmp.eq.s32.totalorder %v919, 1
      %vm936 = vcmp.eq.s32.totalorder %v920, 1
      %vm937 = vcmp.eq.s32.totalorder %v921, 1
      %vm938 = vcmp.eq.s32.totalorder %v922, 1
      %vm939 = vcmp.eq.s32.totalorder %v923, 1
      %vm940 = vcmp.eq.s32.totalorder %v924, 1
      %vm941 = vcmp.eq.s32.totalorder %v925, 1
      %vm942 = vcmp.eq.s32.totalorder %v926, 1
      %vm943 = vcmp.eq.s32.totalorder %v927, 1
      %vm944 = vcmp.eq.s32.totalorder %v928, 1
      %vm945 = vcmp.eq.s32.totalorder %v929, 1
      %vm946 = vcmp.eq.s32.totalorder %v930, 1
      %vm947 = vcmp.eq.s32.totalorder %v931, 1
      %vm948 = vcmp.eq.s32.totalorder %v932, 1
      %vm949 = vcmp.eq.s32.totalorder %v933, 1
      %v950 = vsel %vm934, %v852, 0.0
      %v951 = vsel %vm935, %v853, 0.0
      %v952 = vsel %vm936, %v854, 0.0
      %v953 = vsel %vm937, %v855, 0.0
      %v954 = vsel %vm938, %v856, 0.0
      %v955 = vsel %vm939, %v857, 0.0
      %v956 = vsel %vm940, %v858, 0.0
      %v957 = vsel %vm941, %v859, 0.0
      %v958 = vsel %vm942, %v860, 0.0
      %v959 = vsel %vm943, %v861, 0.0
      %v960 = vsel %vm944, %v862, 0.0
      %v961 = vsel %vm945, %v863, 0.0
      %v962 = vsel %vm946, %v864, 0.0
      %v963 = vsel %vm947, %v865, 0.0
      %v964 = vsel %vm948, %v866, 0.0
      %v965 = vsel %vm949, %v867, 0.0
      %v966 = vpack.c.bf16 %v951, %v950
      %v967 = vpack.c.bf16 %v953, %v952
      %v968 = vpack.c.bf16 %v955, %v954
      %v969 = vpack.c.bf16 %v957, %v956
      %v970 = vpack.c.bf16 %v959, %v958
      %v971 = vpack.c.bf16 %v961, %v960
      %v972 = vpack.c.bf16 %v963, %v962
      %v973 = vpack.c.bf16 %v965, %v964
      %v982 = vunpack.c.l.b16 %v966
      %v983 = vunpack.c.h.b16 %v966
      %v984 = vunpack.c.l.b16 %v967
      %v985 = vunpack.c.h.b16 %v967
      %v986 = vunpack.c.l.b16 %v968
      %v987 = vunpack.c.h.b16 %v968
      %v988 = vunpack.c.l.b16 %v969
      %v989 = vunpack.c.h.b16 %v969
      %v990 = vunpack.c.l.b16 %v970
      %v991 = vunpack.c.h.b16 %v970
      %v992 = vunpack.c.l.b16 %v971
      %v993 = vunpack.c.h.b16 %v971
      %v994 = vunpack.c.l.b16 %v972
      %v995 = vunpack.c.h.b16 %v972
      %v996 = vunpack.c.l.b16 %v973
      %v997 = vunpack.c.h.b16 %v973
      %v998 = vpack.c.b16 %v982, %v982
      %v999 = vpack.c.b16 %v983, %v983
      %v1000 = vpack.c.b16 %v984, %v984
      %v1001 = vpack.c.b16 %v985, %v985
      %v1002 = vpack.c.b16 %v986, %v986
      %v1003 = vpack.c.b16 %v987, %v987
      %v1004 = vpack.c.b16 %v988, %v988
      %v1005 = vpack.c.b16 %v989, %v989
      %v1006 = vpack.c.b16 %v990, %v990
      %v1007 = vpack.c.b16 %v991, %v991
      %v1008 = vpack.c.b16 %v992, %v992
      %v1009 = vpack.c.b16 %v993, %v993
      %v1010 = vpack.c.b16 %v994, %v994
      %v1011 = vpack.c.b16 %v995, %v995
      %v1012 = vpack.c.b16 %v996, %v996
      %v1013 = vpack.c.b16 %v997, %v997
      %1030 = vst [vmem:[#allocation8] sm:$0xf] %v998
      %1031 = vst [vmem:[#allocation8 + $0x4] sm:$0xf] %v999
      %1032 = vst [vmem:[#allocation8 + $0x8] sm:$0xf] %v1000
      %1033 = vst [vmem:[#allocation8 + $0xc] sm:$0xf] %v1001
      %1034 = vst [vmem:[#allocation8 + $0x10] sm:$0xf] %v1002
      %1035 = vst [vmem:[#allocation8 + $0x14] sm:$0xf] %v1003
      %1036 = vst [vmem:[#allocation8 + $0x18] sm:$0xf] %v1004
      %1037 = vst [vmem:[#allocation8 + $0x1c] sm:$0xf] %v1005
      %1038 = vst [vmem:[#allocation8 + $0x20] sm:$0xf] %v1006
      %1039 = vst [vmem:[#allocation8 + $0x24] sm:$0xf] %v1007
      %1040 = vst [vmem:[#allocation8 + $0x28] sm:$0xf] %v1008
      %1041 = vst [vmem:[#allocation8 + $0x2c] sm:$0xf] %v1009
      %1042 = vst [vmem:[#allocation8 + $0x30] sm:$0xf] %v1010
      %1043 = vst [vmem:[#allocation8 + $0x34] sm:$0xf] %v1011
      %1044 = vst [vmem:[#allocation8 + $0x38] sm:$0xf] %v1012
      %1045 = vst [vmem:[#allocation8 + $0x3c] sm:$0xf] %v1013
    $region41: #{tpu_custom_call.1} parent=1 // pred_fallthru
      _
    // Predicated region
    $region42: #{tpu_custom_call.1} parent=1 // pred_check
      _
    $region43: #{tpu_custom_call.1} parent=1 // pred_check_branch
      %1047 = sbr.rel (0) target = $region45
    $region44: #{tpu_custom_call.1} parent=1 // pred_region
      %s1049 = ssub.s32 1024, 1024
      %1050 = vsyncadd [#allocation5], %s1049
      %s1051 = sshll.u32 [#allocation8], 4
      %s1052 = int_to_ptr.vmem [resolvable:$true] %s1051
      %1057 = dma.vmem_to_hbm [thread:$0]  %s1052, 1024, %s6, [#allocation5], 64, 64, 4
    $region45: #{tpu_custom_call.1} parent=1 // pred_fallthru
      _
    // Predicated region
    $region46: #{tpu_custom_call.1} parent=1 // pred_check
      _
    $region47: #{tpu_custom_call.1} parent=1 // pred_check_branch
      %1059 = sbr.rel (0) target = $region49
    $region48: #{tpu_custom_call.1} parent=1 // pred_region
      %1060 = dma.done [#allocation5], 1024
    $region49: #{tpu_custom_call.1} parent=1 // pred_fallthru
      _
    %1061 = vsyncpa [#allocation4], 1
    %1062 = vsyncpa [#allocation7], 1
    %1063 = vsyncpa [#allocation5], 1

</llo_original>
